<compile_context>
chip_gen: v7x
topology: tpu7x:2x2x1
jax: 0.10.0
libtpu: 0.0.40
codegen_flags: <defaults>
</compile_context>

<pallas_src>
import jax
import jax.numpy as jnp
from jax import lax
from jax.experimental import pallas as pl
from jax.experimental.pallas import tpu as pltpu


def _cdiv(a, b):
    return -(-a // b)


def _tpu_generation_config():
    """(target_block_bytes, num_parallel, vmem_limit_bytes) tuned per chip."""
    kind = ""
    try:
        kind = jax.devices()[0].device_kind.lower()
    except Exception:
        pass
    if "v7" in kind:
        # 2 TensorCores/chip, 64 MiB VMEM, ~3.2 TB/s HBM: bigger blocks,
        # split the outer axis across both cores.
        return 6 << 20, 2, 48 << 20
    if "v6" in kind:
        # Single TC; measured mem-bound knee ~4 MiB tiles.
        return 4 << 20, 1, 64 << 20
    if "v5" in kind:
        # Single TC; default scoped VMEM is only 16 MiB, so raise the limit.
        return 4 << 20, 1, 64 << 20
    if "v4" in kind:
        # Megacore: "parallel" axis shards across the two cores.
        return 4 << 20, 2, 64 << 20
    # Unknown chip: conservative defaults, don't touch the VMEM limit.
    return 2 << 20, 1, None


def _make_unicity_kernel(threshold, n_rows, n_det, hw, tb, g_inner, flat):
    def unicity_kernel(x_ref, o_ref):
        o = pl.program_id(0)
        i = pl.program_id(1)

        # Zero this outer block's accumulator on its first inner step.
        @pl.when(i == 0)
        def _():
            o_ref[...] = jnp.zeros_like(o_ref)

        # Sum over detectors, reading one (tb, hw) slice from the ref at a
        # time: peak live f32 intermediate is (tb, hw), not (tb, P*hw).
        if flat:
            s = x_ref[:, 0:hw].astype(jnp.float32)
            for p in range(1, n_det):
                s = s + x_ref[:, p * hw:(p + 1) * hw].astype(jnp.float32)
        else:
            s = x_ref[:, 0, :].astype(jnp.float32)
            for p in range(1, n_det):
                s = s + x_ref[:, p, :].astype(jnp.float32)

        vmax = jnp.max(s, axis=1, keepdims=True)      # (tb, 1) spatial max
        relu = jnp.maximum(vmax - threshold, 0.0)

        # Mask rows past the end of the batch (only the final partial block
        # carries masked rows; the grid is factored exactly so there are no
        # duplicate blocks).  jnp.where is a select, so garbage/NaN in the
        # padded DMA region never leaks into the result.
        row_start = (o * g_inner + i) * tb
        rows = row_start + lax.broadcasted_iota(jnp.int32, (tb, 1), 0)
        relu = jnp.where(rows < n_rows, relu, 0.0)

        # Broadcast the block partial across the lane-dense accumulator.
        o_ref[...] = o_ref[...] + jnp.sum(relu)

    return unicity_kernel


def unicity_loss(output, threshold, *, target_block_bytes=None,
                 num_parallel=None):
    """output: (N, P, H, W) NCHW activation maps (f32 or bf16). Scalar loss."""
    N, P, H, W = output.shape
    if N == 0:
        return jnp.float32(0.0)

    HW = H * W
    row_elems = P * HW

    gen_block, gen_parallel, vmem_limit = _tpu_generation_config()
    if target_block_bytes is None:
        target_block_bytes = gen_block
    if num_parallel is None:
        num_parallel = gen_parallel

    # Lane-aligned flattened path only when every detector slice is a
    # multiple of 128 lanes; otherwise keep (N, P, HW) blocks (full last two
    # dims) so Mosaic never has to relayout unaligned lane slices.
    flat = (HW % 128 == 0)
    if flat:
        x = output.reshape(N, row_elems)
    else:
        x = output.reshape(N, P, HW)

    # Rows per block: target the generation-aware DMA size, multiple of 8
    # sublanes (or the whole batch if it fits in one block).
    row_bytes = row_elems * x.dtype.itemsize
    rows_target = max(1, target_block_bytes // row_bytes)
    if rows_target >= N:
        tb = N                                        # one block == full array
    else:
        tb = max(8, (int(rows_target) // 8) * 8)

    g = _cdiv(N, tb)                                  # total row-blocks

    # Factor the grid exactly: only split across cores when it divides
    # evenly (try a few smaller tb first), so no clamped duplicate blocks.
    if num_parallel > 1 and g >= num_parallel:
        if g % num_parallel != 0 and 8 < tb < N:
            for cand in range(tb - 8, max(8, tb // 2) - 1, -8):
                gc = _cdiv(N, cand)
                if gc % num_parallel == 0:
                    tb, g = cand, gc
                    break
        g_outer = num_parallel if g % num_parallel == 0 else 1
    else:
        g_outer = 1
    g_inner = g // g_outer

    kernel = _make_unicity_kernel(float(threshold), N, P, HW, tb, g_inner,
                                  flat)

    if flat:
        block_shape = (tb, row_elems)
        index_map = lambda o, i: (jnp.minimum(o * g_inner + i, g - 1), 0)
    else:
        block_shape = (tb, P, HW)
        index_map = lambda o, i: (jnp.minimum(o * g_inner + i, g - 1), 0, 0)

    cost = pl.CostEstimate(
        flops=N * (row_elems + HW),
        transcendentals=0,
        bytes_accessed=x.size * x.dtype.itemsize + g_outer * 8 * 128 * 4,
    )

    cp_kwargs = dict(dimension_semantics=("parallel", "arbitrary"))
    if vmem_limit is not None:
        cp_kwargs["vmem_limit_bytes"] = vmem_limit

    out = pl.pallas_call(
        kernel,
        out_shape=jax.ShapeDtypeStruct((g_outer, 8, 128), jnp.float32),
        grid=(g_outer, g_inner),
        in_specs=[pl.BlockSpec(block_shape, index_map)],
        out_specs=pl.BlockSpec((1, 8, 128), lambda o, i: (o, 0, 0)),
        compiler_params=pltpu.CompilerParams(**cp_kwargs),
        cost_estimate=cost,
    )(x)

    # Tiny final reduce over per-core partials + mean over the batch.
    return jnp.sum(out[:, 0, 0]) / jnp.float32(N)


def unicity_loss_ref(output, threshold):
    """Pure-JAX reference mirroring the PyTorch module."""
    s = jnp.sum(output.astype(jnp.float32), axis=1)   # (N, H, W)
    vmax = jnp.max(s, axis=(1, 2))                    # (N,)
    return jnp.mean(jax.nn.relu(vmax - threshold))


if __name__ == "__main__":
    key = jax.random.PRNGKey(0)
    threshold = 1.0

    # Primary small case from the module spec.
    N, P, H, W = 2, 4, 16, 16
    x = jax.random.uniform(key, (N, P, H, W), dtype=jnp.float32)
    loss = jax.block_until_ready(unicity_loss(x, threshold))
    ref = jax.block_until_ready(unicity_loss_ref(x, threshold))
    assert jnp.allclose(loss, ref, atol=1e-5, rtol=1e-5), (loss, ref)

    # Exercise the HW % 128 != 0 fallback path too (H*W = 49).
    key2 = jax.random.PRNGKey(1)
    x2 = jax.random.uniform(key2, (3, 4, 7, 7), dtype=jnp.float32)
    loss2 = jax.block_until_ready(unicity_loss(x2, threshold))
    ref2 = jax.block_until_ready(unicity_loss_ref(x2, threshold))
    assert jnp.allclose(loss2, ref2, atol=1e-5, rtol=1e-5), (loss2, ref2)

    print("KERNEL_OK")
</pallas_src>

<mosaic_0001>
module attributes {stable_mosaic.version = 11 : i64} {
  func.func @unicity_kernel(%arg0: i32, %arg1: i32, %arg2: memref<2x1024xf32, #tpu.memory_space<vmem>>, %arg3: memref<1x8x128xf32, #tpu.memory_space<vmem>>) attributes {dimension_semantics = [#tpu.dimension_semantics<parallel>, #tpu.dimension_semantics<arbitrary>], iteration_bounds = array<i64: 1, 1>, scalar_prefetch = 0 : i64, scratch_operands = 0 : i64, tpu.core_type = #tpu.core_type<tc>, window_params = [{transform_indices = @transform_0, window_bounds = array<i64: 2, 1024>}, {transform_indices = @transform_1, window_bounds = array<i64: 1, 8, 128>}]} {
    %c0_i32 = arith.constant 0 : i32
    %0 = arith.cmpi eq, %arg1, %c0_i32 : i32
    %1 = arith.extui %0 : i1 to i32
    %c0_i32_0 = arith.constant 0 : i32
    %2 = arith.cmpi ne, %1, %c0_i32_0 : i32
    scf.if %2 {
      %cst_16 = arith.constant 0.000000e+00 : f32
      %34 = vector.broadcast %cst_16 : f32 to vector<1x8x128xf32>
      %c0_17 = arith.constant 0 : index
      %c0_18 = arith.constant 0 : index
      %c0_19 = arith.constant 0 : index
      %35 = vector.load %arg3[%c0_17, %c0_18, %c0_19] : memref<1x8x128xf32, #tpu.memory_space<vmem>>, vector<1x8x128xf32>
      tpu.vector_store %arg3[%c0_17, %c0_18, %c0_19], %34 {strides = array<i32>} : memref<1x8x128xf32, #tpu.memory_space<vmem>>, vector<1x8x128xf32>,
    } else {
    }
    %c0 = arith.constant 0 : index
    %c0_1 = arith.constant 0 : index
    %3 = vector.load %arg2[%c0, %c0_1] : memref<2x1024xf32, #tpu.memory_space<vmem>>, vector<2x256xf32>
    %c0_2 = arith.constant 0 : index
    %c256 = arith.constant 256 : index
    %4 = vector.load %arg2[%c0_2, %c256] : memref<2x1024xf32, #tpu.memory_space<vmem>>, vector<2x256xf32>
    %5 = arith.addf %3, %4 : vector<2x256xf32>
    %c0_3 = arith.constant 0 : index
    %c512 = arith.constant 512 : index
    %6 = vector.load %arg2[%c0_3, %c512] : memref<2x1024xf32, #tpu.memory_space<vmem>>, vector<2x256xf32>
    %7 = arith.addf %5, %6 : vector<2x256xf32>
    %c0_4 = arith.constant 0 : index
    %c768 = arith.constant 768 : index
    %8 = vector.load %arg2[%c0_4, %c768] : memref<2x1024xf32, #tpu.memory_space<vmem>>, vector<2x256xf32>
    %9 = arith.addf %7, %8 : vector<2x256xf32>
    %cst = arith.constant dense<0xFF800000> : vector<2xf32>
    %10 = vector.multi_reduction <maximumf>, %9, %cst [1] : vector<2x256xf32> to vector<2xf32>
    %11 = vector.shape_cast %10 : vector<2xf32> to vector<2x1xf32>
    %cst_5 = arith.constant 1.000000e+00 : f32
    %12 = vector.broadcast %cst_5 : f32 to vector<2x1xf32>
    %13 = arith.subf %11, %12 : vector<2x1xf32>
    %cst_6 = arith.constant 0.000000e+00 : f32
    %14 = vector.broadcast %cst_6 : f32 to vector<2x1xf32>
    %15 = arith.maximumf %13, %14 : vector<2x1xf32>
    %c1_i32 = arith.constant 1 : i32
    %16 = arith.muli %arg0, %c1_i32 : i32
    %17 = arith.addi %16, %arg1 : i32
    %c2_i32 = arith.constant 2 : i32
    %18 = arith.muli %17, %c2_i32 : i32
    %19 = tpu.iota {dimensions = array<i32: 0>} : vector<2x1xi32>
    %20 = vector.broadcast %18 : i32 to vector<2x1xi32>
    %21 = arith.addi %20, %19 : vector<2x1xi32>
    %c2_i32_7 = arith.constant 2 : i32
    %22 = vector.broadcast %c2_i32_7 : i32 to vector<2x1xi32>
    %23 = arith.cmpi slt, %21, %22 : vector<2x1xi32>
    %cst_8 = arith.constant 0.000000e+00 : f32
    %24 = vector.broadcast %cst_8 : f32 to vector<2x1xf32>
    %25 = arith.select %23, %15, %24 : vector<2x1xi1>, vector<2x1xf32>
    %c0_9 = arith.constant 0 : index
    %c0_10 = arith.constant 0 : index
    %c0_11 = arith.constant 0 : index
    %26 = vector.load %arg3[%c0_9, %c0_10, %c0_11] : memref<1x8x128xf32, #tpu.memory_space<vmem>>, vector<1x8x128xf32>
    %27 = vector.shape_cast %25 : vector<2x1xf32> to vector<1x2x1xf32>
    %cst_12 = arith.constant dense<0.000000e+00> : vector<1xf32>
    %28 = vector.multi_reduction <add>, %27, %cst_12 [1, 2] : vector<1x2x1xf32> to vector<1xf32>
    %29 = vector.shape_cast %28 : vector<1xf32> to vector<1x1x1xf32>
    %30 = vector.extract %29[0, 0, 0] : f32 from vector<1x1x1xf32>
    %31 = vector.broadcast %30 : f32 to vector<1x8x128xf32>
    %32 = arith.addf %26, %31 : vector<1x8x128xf32>
    %c0_13 = arith.constant 0 : index
    %c0_14 = arith.constant 0 : index
    %c0_15 = arith.constant 0 : index
    %33 = vector.load %arg3[%c0_13, %c0_14, %c0_15] : memref<1x8x128xf32, #tpu.memory_space<vmem>>, vector<1x8x128xf32>
    tpu.vector_store %arg3[%c0_13, %c0_14, %c0_15], %32 {strides = array<i32>} : memref<1x8x128xf32, #tpu.memory_space<vmem>>, vector<1x8x128xf32>,
    return
  }
  func.func @transform_0(%arg0: i32, %arg1: i32) -> (i32, i32) {
    %c1_i32 = arith.constant 1 : i32
    %0 = arith.muli %arg0, %c1_i32 : i32
    %1 = arith.addi %0, %arg1 : i32
    %c0_i32 = arith.constant 0 : i32
    %2 = arith.minsi %1, %c0_i32 : i32
    %c0_i32_0 = arith.constant 0 : i32
    %c0_i32_1 = arith.constant 0 : i32
    return %2, %c0_i32_0 : i32, i32
  }
  func.func @transform_1(%arg0: i32, %arg1: i32) -> (i32, i32, i32) {
    %c0_i32 = arith.constant 0 : i32
    %c0_i32_0 = arith.constant 0 : i32
    %c0_i32_1 = arith.constant 0 : i32
    return %arg0, %c0_i32, %c0_i32_0 : i32, i32, i32
  }
}

</mosaic_0001>

<llo_original>
// kernel: tpu_custom_call.1
$region0: #{tpu_custom_call.1}
  #allocation0 [shape = 'u32[]', space=smem, size = 0x4, offset = 0x4, fixed_abs, tag = 'smem constant byte address 0x4 - core index']
  #allocation1 [shape = 'u32[144,128]{1,0:T(1,128)}', space=vmem, size = 0x12000, scoped, tag = 'internal scratch']
  %s0 = inlined_call_operand.hbm [shape: f32[2,1024], index: 0, kind: input, shape index: {}]
  %s1 = inlined_call_operand.hbm [shape: f32[1,8,128], index: 1, kind: output, shape index: {}]
  %s2 = sld [smem:[#allocation0]]
  $region22: #{tpu_custom_call.1} parent=0
    _
  %s4 = ssub.s32 1, %s2
  %s5 = scalar_select 0, %s4, %s2
  $region1: #{tpu_custom_call.1} parent=0
    #allocation2 [shape = 'u8[8192]{0}', space=vmem, size = 0x2000, scoped, tag = 'input window, operand 0, single buffered']
    #allocation3 [shape = 's32[1]{0}', space=sflag, size = 0x4, scoped, tag = 'scoped memory for tpu_custom_call.1']
    #allocation4 [shape = 's32[1]{0}', space=sflag, size = 0x4, scoped, tag = 'scoped memory for tpu_custom_call.1']
    #allocation5 [shape = 'u8[4096]{0}', space=vmem, size = 0x1000, scoped, tag = 'output window, operand 0, single buffered']
    %6 = vsyncpa [#allocation3], 0
    %7 = vsyncpa [#allocation4], 0
    // Predicated region
    $region2: #{tpu_custom_call.1} parent=1 // pred_check
      _
    $region3: #{tpu_custom_call.1} parent=1 // pred_check_branch
      %9 = sbr.rel (0) target = $region5
    $region4: #{tpu_custom_call.1} parent=1 // pred_region
      %s10 = sadd.s32 0, 0
      %p11 = scmp.lt.s32.totalorder %s10, 0
      %s12 = scalar_select %p11, %s10, 0
      %s14 = ssub.s32 256, 256
      %15 = vsyncadd [#allocation3], %s14
      %s16 = smul.addr %s12, 8
      %s17 = smul.addr %s16, 32
      %s18 = scalar_lea.hbm %s0, %s17
      %s20 = sshll.u32 [#allocation2], 4
      %s21 = int_to_ptr.vmem [resolvable:$true] %s20
      %23 = dma.hbm_to_vmem [thread:$0]  %s18, 256, %s21, [#allocation3]
    $region5: #{tpu_custom_call.1} parent=1 // pred_fallthru
      _
    // Predicated region
    $region6: #{tpu_custom_call.1} parent=1 // pred_check
      _
    $region7: #{tpu_custom_call.1} parent=1 // pred_check_branch
      %25 = sbr.rel (0) target = $region9
    $region8: #{tpu_custom_call.1} parent=1 // pred_region
      %26 = dma.done [#allocation3], 256
    $region9: #{tpu_custom_call.1} parent=1 // pred_fallthru
      _
    %s27 = sadd.s32 0, 0
    %p28 = scmp.lt.s32.totalorder %s27, 0
    %s29 = scalar_select %p28, %s27, 0
    %p30 = scmp.eq.s32.totalorder 0, 0
    // Predicated region
    $region10: #{tpu_custom_call.1} parent=1 // pred_check
      %p31 = pneg %p30
    $region11: #{tpu_custom_call.1} parent=1 // pred_check_branch
      %33 = sbr.rel (%p31) target = $region13
    $region12: #{tpu_custom_call.1} parent=1 // pred_region
      %34 = vst [vmem:[#allocation5] sm:$0xff] 0.0
    $region13: #{tpu_custom_call.1} parent=1 // pred_fallthru
      _
    %v35 = vld [vmem:[#allocation2] sm:$0xf]
    %v36 = vld [vmem:[#allocation2 + $0x4] sm:$0xf]
    %v37 = vadd.f32 %v35, %v36
    %v38 = vld [vmem:[#allocation2 + $0x8] sm:$0xf]
    %v39 = vadd.f32 %v37, %v38
    %v40 = vld [vmem:[#allocation2 + $0xc] sm:$0xf]
    %v41 = vadd.f32 %v39, %v40
    %v44 = vunpack.c.l.s4 1983009808
    %v45 = vunpack.c.0.s8 %v44
    %v46 = vlaneseq
    %v47 = vshrl.u32 %v46, 7
    %v48 = vsub.s32 %v45, %v47
    %v49 = vrot.slane %v41, %v48
    %v50 = vcombine.high %v49, %v49
    %vm53 = vcmask 1041408
    %v54 = vsel %vm53, %v49, -inf
    %v55 = vsel %vm53, %v50, -inf
    %v56 = vmax.f32 %v54, %v55
    %57 = vmax.xlane.f32.xlu0 %v56
    %v58 = vpop.xlane.xlu0 %57
    %v59 = vsub.f32 %v58, 1.0
    %v60 = vmax.f32 %v59, 0.0
    %s61 = sadd.s32 0, 0
    %s62 = smul.u32 %s61, 2
    %v63 = vlaneseq
    %v64 = vshrl.u32 %v63, 7
    %v65 = vstv %s62
    %v66 = vadd.s32 %v65, %v64
    %vm67 = vcmp.lt.s32.totalorder %v66, 2
    %v68 = vsel %vm67, %v60, 0.0
    %v69 = vld [vmem:[#allocation5] sm:$0xff]
    %vm70 = vcmask 1024
    %v71 = vsel %vm70, %v68, 0.0
    %72 = vadd.xlane.f32.xlu0 %v71
    %v73 = vpop.xlane.xlu0 %72
    %v74 = vrot.slane %v73, 4
    %v75 = vadd.f32 %v73, %v74
    %v76 = vrot.slane %v75, 2
    %v77 = vadd.f32 %v75, %v76
    %v78 = vrot.slane %v77, 1
    %v79 = vadd.f32 %v77, %v78
    %s80 = vtos %v79
    %v81 = vstv %s80
    %v82 = vadd.f32 %v69, %v81
    %83 = vst [vmem:[#allocation5] sm:$0xff] %v82
    // Predicated region
    $region14: #{tpu_custom_call.1} parent=1 // pred_check
      _
    $region15: #{tpu_custom_call.1} parent=1 // pred_check_branch
      %85 = sbr.rel (0) target = $region17
    $region16: #{tpu_custom_call.1} parent=1 // pred_region
      %s87 = ssub.s32 128, 128
      %88 = vsyncadd [#allocation4], %s87
      %s90 = sshll.u32 [#allocation5], 4
      %s91 = int_to_ptr.vmem [resolvable:$true] %s90
      %93 = dma.vmem_to_hbm [thread:$0]  %s91, 128, %s1, [#allocation4]
    $region17: #{tpu_custom_call.1} parent=1 // pred_fallthru
      _
    // Predicated region
    $region18: #{tpu_custom_call.1} parent=1 // pred_check
      _
    $region19: #{tpu_custom_call.1} parent=1 // pred_check_branch
      %95 = sbr.rel (0) target = $region21
    $region20: #{tpu_custom_call.1} parent=1 // pred_region
      %96 = dma.done [#allocation4], 128
    $region21: #{tpu_custom_call.1} parent=1 // pred_fallthru
      _
    %97 = vsyncpa [#allocation3], 1
    %98 = vsyncpa [#allocation4], 1

</llo_original>
